<compile_context>
chip_gen: v5e
topology: v5e:2x2
jax: 0.10.0
libtpu: 0.0.40
codegen_flags: <defaults>
</compile_context>

<pallas_src>
import functools

import jax
import jax.numpy as jnp
import numpy as np
from jax.experimental import pallas as pl
from jax.experimental.pallas import tpu as pltpu


# --------------------------------------------------------------------------- #
# device-aware sizing helpers
# --------------------------------------------------------------------------- #
def _vmem_capacity_bytes():
    try:
        return int(pltpu.get_tpu_info().vmem_capacity_bytes)
    except Exception:
        return 64 << 20


def _vmem_limit_bytes():
    cap = _vmem_capacity_bytes()
    if cap >= (96 << 20):            # v5e / v6e: 128 MiB physical VMEM
        return 96 << 20
    # v7x: 64 MiB physical -> leave headroom for compiler-internal scratch
    return max(cap - (16 << 20), 32 << 20)


def _pick_row_tile(M, bytes_per_row, weight_bytes, row_tile=None):
    """Largest row tile (over N*H*W) whose double-buffered footprint fits VMEM.

    Keeps >= 2 grid steps whenever possible so both v7x TensorCores get work
    and the BlockSpec pipeline has depth.
    """
    if row_tile is not None:
        assert M % row_tile == 0 and (row_tile % 8 == 0 or row_tile == M)
        return row_tile
    budget = 0.7 * _vmem_limit_bytes() - weight_bytes
    best = None
    for t in (8, 16, 32, 64, 128, 256, 512, 1024, 2048):
        if t > M or M % t != 0:
            continue
        if M >= 16 and M // t < 2:   # megacore balance / pipeline depth
            continue
        if 2 * t * bytes_per_row <= budget:
            best = t
    if best is None:
        best = 8 if (M % 8 == 0 and M > 8) else M
    return best


def _moments(v):
    """Lane-dense per-channel partial sums of (rows, C) -> (1, 1, 2C)."""
    s = jnp.sum(v, axis=0, keepdims=True)
    sq = jnp.sum(v * v, axis=0, keepdims=True)
    return jnp.concatenate([s, sq], axis=-1).reshape(1, 1, 2 * v.shape[-1])


def _bn_scale_shift(stats2c, count, gamma, beta, eps=1e-5):
    """Fold training-mode BatchNorm (biased batch variance) into scale/shift.

    stats2c: (2C,) = [sum(y) | sum(y*y)] accumulated in f32 (one-pass form,
    variance clamped at 0).
    """
    C = gamma.size
    ssum, ssq = stats2c[:C], stats2c[C:]
    mu = ssum / count
    var = jnp.maximum(ssq / count - mu * mu, 0.0)
    scale = gamma.reshape(-1) * jax.lax.rsqrt(var + eps)
    shift = beta.reshape(-1) - mu * scale
    return (scale.reshape(1, -1).astype(jnp.float32),
            shift.reshape(1, -1).astype(jnp.float32))


# --------------------------------------------------------------------------- #
# kernels
# --------------------------------------------------------------------------- #
def _conv1_kernel(x_ref, w1_ref, *rest, has_sc: bool):
    """conv1 (1x1) [+ projection shortcut 1x1]; bf16 outputs + f32 BN stats."""
    if has_sc:
        wsc_ref, y1_ref, sc_ref, st1_ref, stsc_ref = rest
    else:
        y1_ref, st1_ref = rest

    xb = x_ref[...].astype(jnp.bfloat16)                     # bf16 MXU operands
    y1 = jnp.dot(xb, w1_ref[...], preferred_element_type=jnp.float32)
    st1_ref[...] = _moments(y1)                              # stats before downcast
    y1_ref[...] = y1.astype(y1_ref.dtype)

    if has_sc:
        sc = jnp.dot(xb, wsc_ref[...], preferred_element_type=jnp.float32)
        stsc_ref[...] = _moments(sc)
        sc_ref[...] = sc.astype(sc_ref.dtype)


def _conv2_kernel(y1_ref, s1_ref, h1_ref, w2_ref, y2_ref, st2_ref, pad_ref):
    """bn1-apply + relu + 3x3 conv (stride 1, pad 1) as one im2col matmul."""
    _, H, W, P = y1_ref.shape
    bf16 = jnp.bfloat16

    a = jnp.maximum(
        y1_ref[...].astype(jnp.float32) * s1_ref[...].reshape(1, 1, 1, P)
        + h1_ref[...].reshape(1, 1, 1, P), 0.0).astype(bf16).reshape(H, W, P)

    # Fill the bf16 pad scratch: interior rows carry the left/right zero
    # columns inside the same store; only the top/bottom halo rows get separate
    # zero writes.  Every element is rewritten each grid step, so the
    # "parallel" axis stays safe on both TensorCores (scratch is per-core).
    zcol = jnp.zeros((H, 1, P), bf16)
    pad_ref[1:H + 1, :, :] = jnp.concatenate([zcol, a, zcol], axis=1)
    zrow = jnp.zeros((1, W + 2, P), bf16)
    pad_ref[0:1, :, :] = zrow
    pad_ref[H + 1:H + 2, :, :] = zrow

    # im2col: one (H*W, 9P) @ (9P, P) MXU matmul, built entirely in bf16.
    taps = []
    for k in range(9):
        dy, dx = k // 3, k % 3
        taps.append(pad_ref[dy:dy + H, dx:dx + W, :].reshape(H * W, P))
    col = jnp.concatenate(taps, axis=-1)
    y2 = jnp.dot(col, w2_ref[...], preferred_element_type=jnp.float32)

    st2_ref[...] = _moments(y2)                              # stats before downcast
    y2_ref[...] = y2.astype(y2_ref.dtype).reshape(1, H, W, P)


def _conv3_kernel(y2_ref, s2_ref, h2_ref, w3_ref, y3_ref, st3_ref):
    """bn2-apply + relu + conv3 (1x1); bf16 output + f32 BN stats."""
    a = jnp.maximum(
        y2_ref[...].astype(jnp.float32) * s2_ref[...] + h2_ref[...], 0.0)
    y3 = jnp.dot(a.astype(jnp.bfloat16), w3_ref[...],
                 preferred_element_type=jnp.float32)
    st3_ref[...] = _moments(y3)                              # stats before downcast
    y3_ref[...] = y3.astype(y3_ref.dtype)


def _fuse_kernel(y3_ref, sc_ref, s3_ref, h3_ref, *rest,
                 has_sc: bool, is_last: bool):
    """bn3-apply + shortcut(-bn) + add + relu (+ optional preact output)."""
    if has_sc:
        ssc_ref, hsc_ref, *outs = rest
    else:
        outs = list(rest)
    out_ref = outs[0]

    pre = y3_ref[...].astype(jnp.float32) * s3_ref[...] + h3_ref[...]
    if has_sc:
        pre = pre + (sc_ref[...].astype(jnp.float32) * ssc_ref[...]
                     + hsc_ref[...])
    else:
        pre = pre + sc_ref[...].astype(jnp.float32)   # identity shortcut

    if is_last:
        outs[1][...] = pre.astype(outs[1].dtype)
    out_ref[...] = jnp.maximum(pre, 0.0).astype(out_ref.dtype)


# --------------------------------------------------------------------------- #
# wrapper
# --------------------------------------------------------------------------- #
def bottleneck_forward_nhwc(x_nhwc, params, *, stride=1, is_last=False,
                            row_tile=None):
    """Bottleneck forward in NHWC (transpose-free entry point)."""
    # TODO(synk): stride != 1 (downsampling bottleneck) not implemented.
    assert stride == 1, "only stride=1 implemented"
    N, H, W, Cin = x_nhwc.shape
    P = params["w1"].shape[1]
    C4 = params["w3"].shape[1]
    has_sc = (stride != 1) or (Cin != C4)
    if not has_sc:
        assert Cin == C4, "identity shortcut requires Cin == expansion*planes"

    f32, bf16 = jnp.float32, jnp.bfloat16
    out_dtype = x_nhwc.dtype
    M = N * H * W

    # Footprint-driven row tile for passes 1/3/4 (bytes per row, worst pass).
    xbytes = x_nhwc.dtype.itemsize
    obytes = jnp.dtype(out_dtype).itemsize
    r1 = Cin * xbytes + 2 * P + (2 * C4 if has_sc else 0)
    r3 = 2 * P + 2 * C4
    r4 = 2 * C4 + (2 * C4 if has_sc else Cin * xbytes) \
        + C4 * obytes * (2 if is_last else 1)
    wbytes = 2 * (Cin * P + P * C4 + (Cin * C4 if has_sc else 0))
    TM = _pick_row_tile(M, max(r1, r3, r4), wbytes, row_tile)
    G = M // TM
    vmem_limit = _vmem_limit_bytes()

    def cparams():
        return pltpu.CompilerParams(dimension_semantics=("parallel",),
                                    vmem_limit_bytes=vmem_limit)

    x2d = x_nhwc.reshape(M, Cin)                  # keep native dtype (no upcast)
    # Weights cast to bf16 once (MXU operands); accumulation stays f32.
    w1 = params["w1"].astype(bf16)                           # (Cin, P)
    w2col = params["w2"].astype(bf16).reshape(9 * P, P)      # rows = (dy, dx, ci)
    w3 = params["w3"].astype(bf16)                           # (P, C4)

    def row_spec(c):
        return pl.BlockSpec((TM, c), lambda i: (i, 0))

    def full2(shape):
        return pl.BlockSpec(shape, lambda i: (0, 0))

    def stat_spec(c):
        return pl.BlockSpec((1, 1, 2 * c), lambda i: (i, 0, 0))

    # ---- pass 1: conv1 (1x1) [+ shortcut 1x1] + BN partial sums ------------
    in_specs = [row_spec(Cin), full2((Cin, P))]
    args = [x2d, w1]
    out_shape = [jax.ShapeDtypeStruct((M, P), bf16)]
    out_specs = [row_spec(P)]
    if has_sc:
        in_specs.append(full2((Cin, C4)))
        args.append(params["wsc"].astype(bf16))
        out_shape.append(jax.ShapeDtypeStruct((M, C4), bf16))
        out_specs.append(row_spec(C4))
    out_shape.append(jax.ShapeDtypeStruct((G, 1, 2 * P), f32))
    out_specs.append(stat_spec(P))
    if has_sc:
        out_shape.append(jax.ShapeDtypeStruct((G, 1, 2 * C4), f32))
        out_specs.append(stat_spec(C4))

    res1 = pl.pallas_call(
        functools.partial(_conv1_kernel, has_sc=has_sc),
        grid=(G,), in_specs=in_specs,
        out_specs=tuple(out_specs), out_shape=tuple(out_shape),
        compiler_params=cparams(),
    )(*args)
    if has_sc:
        y1, sc, st1p, stscp = res1
    else:
        y1, st1p = res1
        sc = None

    s1, h1 = _bn_scale_shift(jnp.sum(st1p, axis=(0, 1)), M,
                             params["g1"], params["b1"])

    # ---- pass 2: bn1 + relu + 3x3 conv (bf16 im2col, one matmul per image) -
    # TODO(synk): for large H*W / small N on v7x, strip-tile over H with a
    # 1-row halo so both TensorCores stay busy and the working set shrinks.
    y2_4d, st2p = pl.pallas_call(
        _conv2_kernel,
        grid=(N,),
        in_specs=[pl.BlockSpec((1, H, W, P), lambda n: (n, 0, 0, 0)),
                  pl.BlockSpec((1, P), lambda n: (0, 0)),
                  pl.BlockSpec((1, P), lambda n: (0, 0)),
                  pl.BlockSpec((9 * P, P), lambda n: (0, 0))],
        out_specs=(pl.BlockSpec((1, H, W, P), lambda n: (n, 0, 0, 0)),
                   pl.BlockSpec((1, 1, 2 * P), lambda n: (n, 0, 0))),
        out_shape=(jax.ShapeDtypeStruct((N, H, W, P), bf16),
                   jax.ShapeDtypeStruct((N, 1, 2 * P), f32)),
        scratch_shapes=[pltpu.VMEM((H + 2, W + 2, P), bf16)],
        compiler_params=cparams(),
    )(y1.reshape(N, H, W, P), s1, h1, w2col)

    s2, h2 = _bn_scale_shift(jnp.sum(st2p, axis=(0, 1)), M,
                             params["g2"], params["b2"])

    # ---- pass 3: bn2 + relu + conv3 (1x1) + BN partial sums ----------------
    y3, st3p = pl.pallas_call(
        _conv3_kernel,
        grid=(G,),
        in_specs=[row_spec(P), full2((1, P)), full2((1, P)), full2((P, C4))],
        out_specs=(row_spec(C4), stat_spec(C4)),
        out_shape=(jax.ShapeDtypeStruct((M, C4), bf16),
                   jax.ShapeDtypeStruct((G, 1, 2 * C4), f32)),
        compiler_params=cparams(),
    )(y2_4d.reshape(M, P), s2, h2, w3)

    s3, h3 = _bn_scale_shift(jnp.sum(st3p, axis=(0, 1)), M,
                             params["g3"], params["b3"])

    # ---- pass 4: bn3 + shortcut(-bn) + add + relu --------------------------
    in_specs = [row_spec(C4), row_spec(C4), full2((1, C4)), full2((1, C4))]
    args = [y3, sc if has_sc else x2d, s3, h3]
    if has_sc:
        ssc, hsc = _bn_scale_shift(jnp.sum(stscp, axis=(0, 1)), M,
                                   params["gsc"], params["bsc"])
        in_specs += [full2((1, C4)), full2((1, C4))]
        args += [ssc, hsc]
    out_shape = [jax.ShapeDtypeStruct((M, C4), out_dtype)]
    out_specs = [row_spec(C4)]
    if is_last:
        out_shape.append(jax.ShapeDtypeStruct((M, C4), out_dtype))
        out_specs.append(row_spec(C4))

    res4 = pl.pallas_call(
        functools.partial(_fuse_kernel, has_sc=has_sc, is_last=is_last),
        grid=(G,), in_specs=in_specs,
        out_specs=tuple(out_specs), out_shape=tuple(out_shape),
        compiler_params=cparams(),
    )(*args)

    out = res4[0].reshape(N, H, W, C4)
    if is_last:
        return out, res4[1].reshape(N, H, W, C4)
    return out


def bottleneck_forward(x_nchw, params, *, stride=1, is_last=False,
                       row_tile=None):
    """PyTorch-convention (NCHW) wrapper.

    For a full ResNet keep activations NHWC and call bottleneck_forward_nhwc
    directly so the NCHW<->NHWC transposes happen once at the network boundary.
    """
    x = jnp.transpose(x_nchw, (0, 2, 3, 1))
    res = bottleneck_forward_nhwc(x, params, stride=stride, is_last=is_last,
                                  row_tile=row_tile)
    if is_last:
        out, pre = res
        return (jnp.transpose(out, (0, 3, 1, 2)),
                jnp.transpose(pre, (0, 3, 1, 2)))
    return jnp.transpose(res, (0, 3, 1, 2))


# --------------------------------------------------------------------------- #
# params + reference
# --------------------------------------------------------------------------- #
def init_params(key, in_planes, planes, expansion=4):
    C4 = expansion * planes
    ks = jax.random.split(key, 10)

    def nrm(k, shape, scale):
        return (scale * jax.random.normal(k, shape)).astype(jnp.float32)

    return {
        # conv weights stored as (Cin, Cout) for 1x1 and HWIO for 3x3
        "w1": nrm(ks[0], (in_planes, planes), 0.3),
        "w2": nrm(ks[1], (3, 3, planes, planes), 0.2),
        "w3": nrm(ks[2], (planes, C4), 0.3),
        "wsc": nrm(ks[3], (in_planes, C4), 0.3),
        # BatchNorm affine params, shaped (1, C) for lane-friendly broadcast
        "g1": (1.0 + nrm(ks[4], (1, planes), 0.1)).astype(jnp.float32),
        "b1": nrm(ks[5], (1, planes), 0.1),
        "g2": (1.0 + nrm(ks[6], (1, planes), 0.1)).astype(jnp.float32),
        "b2": nrm(ks[7], (1, planes), 0.1),
        "g3": (1.0 + nrm(ks[8], (1, C4), 0.1)).astype(jnp.float32),
        "b3": nrm(ks[9], (1, C4), 0.1),
        "gsc": jnp.ones((1, C4), jnp.float32),
        "bsc": jnp.zeros((1, C4), jnp.float32),
    }


def ref_bottleneck(x_nchw, p, stride=1, matmul_dtype=None, store_dtype=None):
    """Pure-JAX reference (lax.conv).

    matmul_dtype: cast conv operands (MXU precision emulation).
    store_dtype:  round post-conv activations to this dtype before BN-apply
                  (inter-pass HBM storage emulation); BN statistics are still
                  computed from the full-precision conv output, matching the
                  kernel's stats-before-downcast behaviour.
    """
    x = jnp.transpose(x_nchw, (0, 2, 3, 1)).astype(jnp.float32)
    Cin = x.shape[-1]
    C4 = p["w3"].shape[1]

    def conv(y, w, ksize, s):
        if matmul_dtype is not None:
            y = y.astype(matmul_dtype)
            w = w.astype(matmul_dtype)
        if ksize == 1:
            w = w.reshape(1, 1, *w.shape)
            pad = "VALID"
        else:
            pad = [(1, 1), (1, 1)]
        return jax.lax.conv_general_dilated(
            y, w, window_strides=(s, s), padding=pad,
            dimension_numbers=("NHWC", "HWIO", "NHWC"),
            preferred_element_type=jnp.float32,
            precision=jax.lax.Precision.HIGHEST)

    def bn(y, g, b):
        mu = jnp.mean(y, axis=(0, 1, 2), keepdims=True)
        var = jnp.mean((y - mu) ** 2, axis=(0, 1, 2), keepdims=True)
        ya = (y.astype(store_dtype).astype(jnp.float32)
              if store_dtype is not None else y)
        return ((ya - mu) * jax.lax.rsqrt(var + 1e-5)
                * g.reshape(1, 1, 1, -1) + b.reshape(1, 1, 1, -1))

    h = jax.nn.relu(bn(conv(x, p["w1"], 1, 1), p["g1"], p["b1"]))
    h = jax.nn.relu(bn(conv(h, p["w2"], 3, stride), p["g2"], p["b2"]))
    h = bn(conv(h, p["w3"], 1, 1), p["g3"], p["b3"])
    if stride != 1 or Cin != C4:
        sc = bn(conv(x, p["wsc"], 1, stride), p["gsc"], p["bsc"])
    else:
        sc = x
    pre = h + sc
    out = jax.nn.relu(pre)
    return jnp.transpose(out, (0, 3, 1, 2)), jnp.transpose(pre, (0, 3, 1, 2))


# --------------------------------------------------------------------------- #
# test
# --------------------------------------------------------------------------- #
if __name__ == "__main__":
    key = jax.random.PRNGKey(0)
    k1, k2, k3, k4 = jax.random.split(key, 4)

    # --- case 1: projection shortcut (Cin != expansion*planes), is_last ----
    N, Cin, H, W = 2, 4, 16, 16
    planes = 4                                  # expansion*planes = 16 != Cin
    x = jax.random.normal(k1, (N, Cin, H, W), jnp.float32)
    params = init_params(k2, Cin, planes)

    out, preact = bottleneck_forward(x, params, stride=1, is_last=True)
    out = jax.block_until_ready(out)
    preact = jax.block_until_ready(preact)

    # Tight check vs a reference matching the kernel's numerics (bf16 MXU
    # operands + bf16 inter-pass storage, BN stats from f32 conv outputs).
    ref_out_bf, ref_pre_bf = ref_bottleneck(x, params, stride=1,
                                            matmul_dtype=jnp.bfloat16,
                                            store_dtype=jnp.bfloat16)
    np.testing.assert_allclose(np.asarray(out), np.asarray(ref_out_bf),
                               atol=2e-2, rtol=2e-2)
    np.testing.assert_allclose(np.asarray(preact), np.asarray(ref_pre_bf),
                               atol=2e-2, rtol=2e-2)

    # Looser check vs the full-f32 (PyTorch-semantics) reference; tolerance
    # bounds bf16 operand/storage quantization through three normalized layers.
    ref_out_f32, ref_pre_f32 = ref_bottleneck(x, params, stride=1)
    np.testing.assert_allclose(np.asarray(out), np.asarray(ref_out_f32),
                               atol=1.5e-1, rtol=1.5e-1)
    np.testing.assert_allclose(np.asarray(preact), np.asarray(ref_pre_f32),
                               atol=1.5e-1, rtol=1.5e-1)

    # --- case 2: identity shortcut (Cin == expansion*planes), not last -----
    Cin2, planes2, H2, W2 = 16, 4, 8, 8
    x2 = jax.random.normal(k3, (N, Cin2, H2, W2), jnp.float32)
    params2 = init_params(k4, Cin2, planes2)
    out2 = bottleneck_forward(x2, params2, stride=1, is_last=False)
    out2 = jax.block_until_ready(out2)
    ref_out2, _ = ref_bottleneck(x2, params2, stride=1,
                                 matmul_dtype=jnp.bfloat16,
                                 store_dtype=jnp.bfloat16)
    np.testing.assert_allclose(np.asarray(out2), np.asarray(ref_out2),
                               atol=2e-2, rtol=2e-2)

    print("KERNEL_OK")
</pallas_src>

<mosaic_0001>
module attributes {stable_mosaic.version = 11 : i64} {
  func.func @_conv1_kernel(%arg0: i32, %arg1: memref<256x4xf32, #tpu.memory_space<vmem>>, %arg2: memref<4x4xbf16, #tpu.memory_space<vmem>>, %arg3: memref<4x16xbf16, #tpu.memory_space<vmem>>, %arg4: memref<256x4xbf16, #tpu.memory_space<vmem>>, %arg5: memref<256x16xbf16, #tpu.memory_space<vmem>>, %arg6: memref<1x1x8xf32, #tpu.memory_space<vmem>>, %arg7: memref<1x1x32xf32, #tpu.memory_space<vmem>>) attributes {dimension_semantics = [#tpu.dimension_semantics<parallel>], iteration_bounds = array<i64: 2>, scalar_prefetch = 0 : i64, scratch_operands = 0 : i64, tpu.core_type = #tpu.core_type<tc>, window_params = [{transform_indices = @transform_0, window_bounds = array<i64: 256, 4>}, {pipeline_mode = #tpu.pipeline_mode<synchronous>, transform_indices = @transform_1, window_bounds = array<i64: 4, 4>}, {pipeline_mode = #tpu.pipeline_mode<synchronous>, transform_indices = @transform_2, window_bounds = array<i64: 4, 16>}, {transform_indices = @transform_3, window_bounds = array<i64: 256, 4>}, {transform_indices = @transform_4, window_bounds = array<i64: 256, 16>}, {transform_indices = @transform_5, window_bounds = array<i64: 1, 1, 8>}, {transform_indices = @transform_6, window_bounds = array<i64: 1, 1, 32>}]} {
    %c0 = arith.constant 0 : index
    %c0_0 = arith.constant 0 : index
    %0 = vector.load %arg1[%c0, %c0_0] : memref<256x4xf32, #tpu.memory_space<vmem>>, vector<256x4xf32>
    %1 = arith.truncf %0 : vector<256x4xf32> to vector<256x4xbf16>
    %c0_1 = arith.constant 0 : index
    %c0_2 = arith.constant 0 : index
    %2 = vector.load %arg2[%c0_1, %c0_2] : memref<4x4xbf16, #tpu.memory_space<vmem>>, vector<4x4xbf16>
    %cst = arith.constant dense<0.000000e+00> : vector<256x4xf32>
    %3 = tpu.matmul %1, %2, %cst {dimension_numbers = #tpu.dot_dimension_numbers<[1], [0], [0], [1], [0, 0, 1, 1], [], []>} : vector<256x4xbf16>, vector<4x4xbf16>, vector<256x4xf32> -> vector<256x4xf32>
    %cst_3 = arith.constant dense<0.000000e+00> : vector<4xf32>
    %4 = vector.multi_reduction <add>, %3, %cst_3 [0] : vector<256x4xf32> to vector<4xf32>
    %5 = vector.shape_cast %4 : vector<4xf32> to vector<1x4xf32>
    %6 = arith.mulf %3, %3 : vector<256x4xf32>
    %cst_4 = arith.constant dense<0.000000e+00> : vector<4xf32>
    %7 = vector.multi_reduction <add>, %6, %cst_4 [0] : vector<256x4xf32> to vector<4xf32>
    %8 = vector.shape_cast %7 : vector<4xf32> to vector<1x4xf32>
    %9 = tpu.concatenate %5, %8 in 1 : vector<1x4xf32>, vector<1x4xf32> -> vector<1x8xf32>
    %10 = vector.shape_cast %9 : vector<1x8xf32> to vector<1x1x8xf32>
    %c0_5 = arith.constant 0 : index
    %c0_6 = arith.constant 0 : index
    %c0_7 = arith.constant 0 : index
    %11 = vector.load %arg6[%c0_5, %c0_6, %c0_7] : memref<1x1x8xf32, #tpu.memory_space<vmem>>, vector<1x1x8xf32>
    tpu.vector_store %arg6[%c0_5, %c0_6, %c0_7], %10 {strides = array<i32>} : memref<1x1x8xf32, #tpu.memory_space<vmem>>, vector<1x1x8xf32>,
    %12 = arith.truncf %3 : vector<256x4xf32> to vector<256x4xbf16>
    %c0_8 = arith.constant 0 : index
    %c0_9 = arith.constant 0 : index
    %13 = vector.load %arg4[%c0_8, %c0_9] : memref<256x4xbf16, #tpu.memory_space<vmem>>, vector<256x4xbf16>
    tpu.vector_store %arg4[%c0_8, %c0_9], %12 {strides = array<i32>} : memref<256x4xbf16, #tpu.memory_space<vmem>>, vector<256x4xbf16>,
    %c0_10 = arith.constant 0 : index
    %c0_11 = arith.constant 0 : index
    %14 = vector.load %arg3[%c0_10, %c0_11] : memref<4x16xbf16, #tpu.memory_space<vmem>>, vector<4x16xbf16>
    %cst_12 = arith.constant dense<0.000000e+00> : vector<256x16xf32>
    %15 = tpu.matmul %1, %14, %cst_12 {dimension_numbers = #tpu.dot_dimension_numbers<[1], [0], [0], [1], [0, 0, 1, 1], [], []>} : vector<256x4xbf16>, vector<4x16xbf16>, vector<256x16xf32> -> vector<256x16xf32>
    %cst_13 = arith.constant dense<0.000000e+00> : vector<16xf32>
    %16 = vector.multi_reduction <add>, %15, %cst_13 [0] : vector<256x16xf32> to vector<16xf32>
    %17 = vector.shape_cast %16 : vector<16xf32> to vector<1x16xf32>
    %18 = arith.mulf %15, %15 : vector<256x16xf32>
    %cst_14 = arith.constant dense<0.000000e+00> : vector<16xf32>
    %19 = vector.multi_reduction <add>, %18, %cst_14 [0] : vector<256x16xf32> to vector<16xf32>
    %20 = vector.shape_cast %19 : vector<16xf32> to vector<1x16xf32>
    %21 = tpu.concatenate %17, %20 in 1 : vector<1x16xf32>, vector<1x16xf32> -> vector<1x32xf32>
    %22 = vector.shape_cast %21 : vector<1x32xf32> to vector<1x1x32xf32>
    %c0_15 = arith.constant 0 : index
    %c0_16 = arith.constant 0 : index
    %c0_17 = arith.constant 0 : index
    %23 = vector.load %arg7[%c0_15, %c0_16, %c0_17] : memref<1x1x32xf32, #tpu.memory_space<vmem>>, vector<1x1x32xf32>
    tpu.vector_store %arg7[%c0_15, %c0_16, %c0_17], %22 {strides = array<i32>} : memref<1x1x32xf32, #tpu.memory_space<vmem>>, vector<1x1x32xf32>,
    %24 = arith.truncf %15 : vector<256x16xf32> to vector<256x16xbf16>
    %c0_18 = arith.constant 0 : index
    %c0_19 = arith.constant 0 : index
    %25 = vector.load %arg5[%c0_18, %c0_19] : memref<256x16xbf16, #tpu.memory_space<vmem>>, vector<256x16xbf16>
    tpu.vector_store %arg5[%c0_18, %c0_19], %24 {strides = array<i32>} : memref<256x16xbf16, #tpu.memory_space<vmem>>, vector<256x16xbf16>,
    return
  }
  func.func @transform_0(%arg0: i32) -> (i32, i32) {
    %c0_i32 = arith.constant 0 : i32
    %c0_i32_0 = arith.constant 0 : i32
    return %arg0, %c0_i32 : i32, i32
  }
  func.func @transform_1(%arg0: i32) -> (i32, i32) {
    %c0_i32 = arith.constant 0 : i32
    %c0_i32_0 = arith.constant 0 : i32
    %c0_i32_1 = arith.constant 0 : i32
    return %c0_i32, %c0_i32_0 : i32, i32
  }
  func.func @transform_2(%arg0: i32) -> (i32, i32) {
    %c0_i32 = arith.constant 0 : i32
    %c0_i32_0 = arith.constant 0 : i32
    %c0_i32_1 = arith.constant 0 : i32
    return %c0_i32, %c0_i32_0 : i32, i32
  }
  func.func @transform_3(%arg0: i32) -> (i32, i32) {
    %c0_i32 = arith.constant 0 : i32
    %c0_i32_0 = arith.constant 0 : i32
    return %arg0, %c0_i32 : i32, i32
  }
  func.func @transform_4(%arg0: i32) -> (i32, i32) {
    %c0_i32 = arith.constant 0 : i32
    %c0_i32_0 = arith.constant 0 : i32
    return %arg0, %c0_i32 : i32, i32
  }
  func.func @transform_5(%arg0: i32) -> (i32, i32, i32) {
    %c0_i32 = arith.constant 0 : i32
    %c0_i32_0 = arith.constant 0 : i32
    %c0_i32_1 = arith.constant 0 : i32
    return %arg0, %c0_i32, %c0_i32_0 : i32, i32, i32
  }
  func.func @transform_6(%arg0: i32) -> (i32, i32, i32) {
    %c0_i32 = arith.constant 0 : i32
    %c0_i32_0 = arith.constant 0 : i32
    %c0_i32_1 = arith.constant 0 : i32
    return %arg0, %c0_i32, %c0_i32_0 : i32, i32, i32
  }
}

</mosaic_0001>

<llo_original>
// kernel: tpu_custom_call.1
$region0: #{tpu_custom_call.1}
  #allocation0 [shape = 'u32[]', space=smem, size = 0x4, offset = 0x4, fixed_abs, tag = 'smem constant byte address 0x4 - core index']
  #allocation1 [shape = 'u32[72,128]{1,0:T(1,128)}', space=vmem, size = 0x9000, scoped, tag = 'internal scratch']
  %s0 = inlined_call_operand.vmem [shape: f32[512,4], index: 0, kind: input, shape index: {}]
  %s1 = inlined_call_operand.vmem [shape: bf16[4,4], index: 1, kind: input, shape index: {}]
  %s2 = inlined_call_operand.vmem [shape: bf16[4,16], index: 2, kind: input, shape index: {}]
  %s3 = inlined_call_operand.vmem [shape: bf16[512,4], index: 3, kind: output, shape index: {0}]
  %s4 = inlined_call_operand.vmem [shape: bf16[512,16], index: 4, kind: output, shape index: {1}]
  %s5 = inlined_call_operand.hbm [shape: f32[2,1,8], index: 5, kind: output, shape index: {2}]
  %s6 = inlined_call_operand.hbm [shape: f32[2,1,32], index: 6, kind: output, shape index: {3}]
  %7 = xla_tuple %s3, %s4, %s5, %s6
  %s8 = sld [smem:[#allocation0]]
  $region69: #{tpu_custom_call.1} parent=0
    _
  %s10 = ssub.s32 1, %s8
  %s11 = scalar_select 0, %s10, %s8
  $region1: #{tpu_custom_call.1} parent=0
    #allocation2 [shape = 'u8[1024]{0}', space=vmem, size = 0x400, scoped, tag = 'output window, operand 2']
    #allocation3 [shape = 's32[2]{0}', space=sflag, size = 0x8, scoped, tag = 'scoped memory for tpu_custom_call.1']
    #allocation4 [shape = 'u8[1024]{0}', space=vmem, size = 0x400, scoped, tag = 'output window, operand 3']
    #allocation5 [shape = 's32[2]{0}', space=sflag, size = 0x8, scoped, tag = 'scoped memory for tpu_custom_call.1']
    %12 = vsyncpa [#allocation3], 0
    %s13 = scalar_lea.sflag [#allocation3], 1
    %14 = vsyncpa %s13, 0
    %15 = vsyncpa [#allocation5], 0
    %s16 = scalar_lea.sflag [#allocation5], 1
    %17 = vsyncpa %s16, 0
    loop: start=0, step=1, limit=4
    $region2: #{tpu_custom_call.1} parent=1 // loop_pre_header
      _
    $region3: #{tpu_custom_call.1} parent=1 // loop_header
      %s19 = sphi 0, %s23
      %p20 = scmp.ge.s32.totalorder %s19, 4
      %s29 = sphi 0, %s31
      %s32 = sphi 0, %s29
      %s33 = sphi 0, %s32
      %s49 = sphi 0, %s33
      %s53 = sphi 0, %s53
      %s55 = sphi 0, %s53
      %s56 = sphi 0, %s55
      %s70 = sphi 0, %s56
      %s74 = sphi 0, %s74
      %s76 = sphi 0, %s74
      %s77 = sphi 0, %s76
      %s91 = sphi 0, %s77
      %s97 = sphi 0, %s99
      %s100 = sphi 0, %s97
      %s101 = sphi 0, %s100
      %s117 = sphi 0, %s101
      %s123 = sphi 0, %s125
      %s126 = sphi 0, %s123
      %s127 = sphi 0, %s126
      %s143 = sphi 0, %s127
      %s149 = sphi 0, %s151
      %s152 = sphi 0, %s149
      %s153 = sphi 0, %s152
      %s169 = sphi 0, %s153
      %s175 = sphi 0, %s177
      %s178 = sphi 0, %s175
      %s179 = sphi 0, %s178
      %s195 = sphi 0, %s179
    $region4: #{tpu_custom_call.1} parent=1 // loop_header_branch
      %22 = sbr.rel (%p20) target = $region8
    $region5: #{tpu_custom_call.1} parent=1 // loop_body
      %s24 = ssub.s32 %s19, 1
      %s25 = ssub.s32 %s19, 2
      %s26 = sadd.s32 %s19, 1
      %s27 = ssub.s32 %s19, %s26
      %p28 = scmp.eq.s32.totalorder %s27, 0
      %s30 = sadd.s32 %s29, 1
      %s31 = scalar_select %p28, %s29, %s30
      %p34 = pneg %p28
      %p35 = scmp.eq.s32.totalorder %s19, 1
      %p36 = por %p34, %p35
      %p37 = scmp.ne.s32.totalorder %s29, %s32
      %p38 = scmp.eq.s32.totalorder %s19, 0
      %p39 = por %p37, %p38
      %p40 = scmp.ne.s32.totalorder %s29, %s32
      %p41 = scmp.eq.s32.totalorder %s24, 1
      %p42 = por %p40, %p41
      %p43 = scmp.ne.s32.totalorder %s32, %s33
      %p44 = scmp.eq.s32.totalorder %s24, 0
      %p45 = por %p43, %p44
      %p46 = scmp.ne.s32.totalorder %s32, %s33
      %p47 = scmp.eq.s32.totalorder %s25, 1
      %p48 = por %p46, %p47
      %p50 = scmp.ne.s32.totalorder %s33, %s49
      %p51 = scmp.eq.s32.totalorder %s25, 0
      %p52 = por %p50, %p51
      %s54 = sadd.s32 %s53, 1
      %p57 = scmp.eq.s32.totalorder %s19, 1
      %p58 = scmp.ne.s32.totalorder %s53, %s55
      %p59 = scmp.eq.s32.totalorder %s19, 0
      %p60 = por %p58, %p59
      %p61 = scmp.ne.s32.totalorder %s53, %s55
      %p62 = scmp.eq.s32.totalorder %s24, 1
      %p63 = por %p61, %p62
      %p64 = scmp.ne.s32.totalorder %s55, %s56
      %p65 = scmp.eq.s32.totalorder %s24, 0
      %p66 = por %p64, %p65
      %p67 = scmp.ne.s32.totalorder %s55, %s56
      %p68 = scmp.eq.s32.totalorder %s25, 1
      %p69 = por %p67, %p68
      %p71 = scmp.ne.s32.totalorder %s56, %s70
      %p72 = scmp.eq.s32.totalorder %s25, 0
      %p73 = por %p71, %p72
      %s75 = sadd.s32 %s74, 1
      %p78 = scmp.eq.s32.totalorder %s19, 1
      %p79 = scmp.ne.s32.totalorder %s74, %s76
      %p80 = scmp.eq.s32.totalorder %s19, 0
      %p81 = por %p79, %p80
      %p82 = scmp.ne.s32.totalorder %s74, %s76
      %p83 = scmp.eq.s32.totalorder %s24, 1
      %p84 = por %p82, %p83
      %p85 = scmp.ne.s32.totalorder %s76, %s77
      %p86 = scmp.eq.s32.totalorder %s24, 0
      %p87 = por %p85, %p86
      %p88 = scmp.ne.s32.totalorder %s76, %s77
      %p89 = scmp.eq.s32.totalorder %s25, 1
      %p90 = por %p88, %p89
      %p92 = scmp.ne.s32.totalorder %s77, %s91
      %p93 = scmp.eq.s32.totalorder %s25, 0
      %p94 = por %p92, %p93
      %s95 = ssub.s32 %s19, %s26
      %p96 = scmp.eq.s32.totalorder %s95, 0
      %s98 = sadd.s32 %s97, 1
      %s99 = scalar_select %p96, %s97, %s98
      %p102 = pneg %p96
      %p103 = scmp.eq.s32.totalorder %s19, 1
      %p104 = por %p102, %p103
      %p105 = scmp.ne.s32.totalorder %s97, %s100
      %p106 = scmp.eq.s32.totalorder %s19, 0
      %p107 = por %p105, %p106
      %p108 = scmp.ne.s32.totalorder %s97, %s100
      %p109 = scmp.eq.s32.totalorder %s24, 1
      %p110 = por %p108, %p109
      %p111 = scmp.ne.s32.totalorder %s100, %s101
      %p112 = scmp.eq.s32.totalorder %s24, 0
      %p113 = por %p111, %p112
      %p114 = scmp.ne.s32.totalorder %s100, %s101
      %p115 = scmp.eq.s32.totalorder %s25, 1
      %p116 = por %p114, %p115
      %p118 = scmp.ne.s32.totalorder %s101, %s117
      %p119 = scmp.eq.s32.totalorder %s25, 0
      %p120 = por %p118, %p119
      %s121 = ssub.s32 %s19, %s26
      %p122 = scmp.eq.s32.totalorder %s121, 0
      %s124 = sadd.s32 %s123, 1
      %s125 = scalar_select %p122, %s123, %s124
      %p128 = pneg %p122
      %p129 = scmp.eq.s32.totalorder %s19, 1
      %p130 = por %p128, %p129
      %p131 = scmp.ne.s32.totalorder %s123, %s126
      %p132 = scmp.eq.s32.totalorder %s19, 0
      %p133 = por %p131, %p132
      %p134 = scmp.ne.s32.totalorder %s123, %s126
      %p135 = scmp.eq.s32.totalorder %s24, 1
      %p136 = por %p134, %p135
      %p137 = scmp.ne.s32.totalorder %s126, %s127
      %p138 = scmp.eq.s32.totalorder %s24, 0
      %p139 = por %p137, %p138
      %p140 = scmp.ne.s32.totalorder %s126, %s127
      %p141 = scmp.eq.s32.totalorder %s25, 1
      %p142 = por %p140, %p141
      %p144 = scmp.ne.s32.totalorder %s127, %s143
      %p145 = scmp.eq.s32.totalorder %s25, 0
      %p146 = por %p144, %p145
      %s147 = ssub.s32 %s19, %s26
      %p148 = scmp.eq.s32.totalorder %s147, 0
      %s150 = sadd.s32 %s149, 1
      %s151 = scalar_select %p148, %s149, %s150
      %p154 = pneg %p148
      %p155 = scmp.eq.s32.totalorder %s19, 1
      %p156 = por %p154, %p155
      %p157 = scmp.ne.s32.totalorder %s149, %s152
      %p158 = scmp.eq.s32.totalorder %s19, 0
      %p159 = por %p157, %p158
      %p160 = scmp.ne.s32.totalorder %s149, %s152
      %p161 = scmp.eq.s32.totalorder %s24, 1
      %p162 = por %p160, %p161
      %p163 = scmp.ne.s32.totalorder %s152, %s153
      %p164 = scmp.eq.s32.totalorder %s24, 0
      %p165 = por %p163, %p164
      %p166 = scmp.ne.s32.totalorder %s152, %s153
      %p167 = scmp.eq.s32.totalorder %s25, 1
      %p168 = por %p166, %p167
      %p170 = scmp.ne.s32.totalorder %s153, %s169
      %p171 = scmp.eq.s32.totalorder %s25, 0
      %p172 = por %p170, %p171
      %s173 = ssub.s32 %s19, %s26
      %p174 = scmp.eq.s32.totalorder %s173, 0
      %s176 = sadd.s32 %s175, 1
      %s177 = scalar_select %p174, %s175, %s176
      %p180 = pneg %p174
      %p181 = scmp.eq.s32.totalorder %s19, 1
      %p182 = por %p180, %p181
      %p183 = scmp.ne.s32.totalorder %s175, %s178
      %p184 = scmp.eq.s32.totalorder %s19, 0
      %p185 = por %p183, %p184
      %p186 = scmp.ne.s32.totalorder %s175, %s178
      %p187 = scmp.eq.s32.totalorder %s24, 1
      %p188 = por %p186, %p187
      %p189 = scmp.ne.s32.totalorder %s178, %s179
      %p190 = scmp.eq.s32.totalorder %s24, 0
      %p191 = por %p189, %p190
      %p192 = scmp.ne.s32.totalorder %s178, %s179
      %p193 = scmp.eq.s32.totalorder %s25, 1
      %p194 = por %p192, %p193
      %p196 = scmp.ne.s32.totalorder %s179, %s195
      %p197 = scmp.eq.s32.totalorder %s25, 0
      %p198 = por %p196, %p197
      %p199 = scmp.le.s32.totalorder 1, %s19
      %p200 = scmp.lt.s32.totalorder %s19, 3
      %p201 = pnand %p199, %p200
      %p202 = pneg %p201
      // Predicated region
      $region9: #{tpu_custom_call.1} parent=5 // pred_check
        _
      $region10: #{tpu_custom_call.1} parent=5 // pred_check_branch
        %204 = sbr.rel (%p201) target = $region12
      $region11: #{tpu_custom_call.1} parent=5 // pred_region
        %s205 = ssub.s32 %s19, 1
        // Predicated region
        $region13: #{tpu_custom_call.1} parent=11 // pred_check
          %p206 = pneg %p66
        $region14: #{tpu_custom_call.1} parent=11 // pred_check_branch
          %208 = sbr.rel (%p206) target = $region16
        $region15: #{tpu_custom_call.1} parent=11 // pred_region
          _
        $region16: #{tpu_custom_call.1} parent=11 // pred_fallthru
          _
        // Predicated region
        $region17: #{tpu_custom_call.1} parent=11 // pred_check
          %p209 = pneg %p87
        $region18: #{tpu_custom_call.1} parent=11 // pred_check_branch
          %211 = sbr.rel (%p209) target = $region20
        $region19: #{tpu_custom_call.1} parent=11 // pred_region
          _
        $region20: #{tpu_custom_call.1} parent=11 // pred_fallthru
          _
      $region12: #{tpu_custom_call.1} parent=5 // pred_fallthru
        _
      %p212 = scmp.lt.s32.totalorder %s19, 2
      // Predicated region
      $region21: #{tpu_custom_call.1} parent=5 // pred_check
        %p213 = pneg %p212
      $region22: #{tpu_custom_call.1} parent=5 // pred_check_branch
        %215 = sbr.rel (%p213) target = $region24
      $region23: #{tpu_custom_call.1} parent=5 // pred_region
        // Predicated region
        $region25: #{tpu_custom_call.1} parent=23 // pred_check
          %p216 = pneg %p39
        $region26: #{tpu_custom_call.1} parent=23 // pred_check_branch
          %218 = sbr.rel (%p216) target = $region28
        $region27: #{tpu_custom_call.1} parent=23 // pred_region
          %s219 = smul.u32 32, %s19
          %p220 = scmp.lt.s32.totalorder %s219, 63
          %s221 = scalar_select %p220, %s219, 63
          %s222 = smul.addr %s221, 8
          %s223 = scalar_lea.vmem %s0, %s222
          %s224 = smul.u32 32, %s19
        $region28: #{tpu_custom_call.1} parent=23 // pred_fallthru
          _
      $region24: #{tpu_custom_call.1} parent=5 // pred_fallthru
        _
      %p225 = scmp.le.s32.totalorder 1, %s19
      %p226 = scmp.lt.s32.totalorder %s19, 3
      %p227 = pnand %p225, %p226
      %p228 = pneg %p227
      // Predicated region
      $region29: #{tpu_custom_call.1} parent=5 // pred_check
        _
      $region30: #{tpu_custom_call.1} parent=5 // pred_check_branch
        %230 = sbr.rel (%p227) target = $region32
      $region31: #{tpu_custom_call.1} parent=5 // pred_region
        %s231 = ssub.s32 %s19, 1
        %s232 = smul.u32 32, %s24
        %p233 = scmp.lt.s32.totalorder %s232, 63
        %s234 = scalar_select %p233, %s232, 63
        %s235 = smul.addr %s234, 8
        %s236 = scalar_lea.vmem %s0, %s235
        %p237 = pneg %p45
        %p238 = pneg %p42
        %p239 = pneg %p66
        %p240 = pneg %p63
        %p241 = pneg %p87
        %p242 = pneg %p84
        %p243 = pneg %p113
        %p244 = pneg %p110
        %s245 = smul.u32 32, %s24
        %p246 = scmp.lt.s32.totalorder %s245, 63
        %s247 = scalar_select %p246, %s245, 63
        %s248 = smul.addr %s247, 4
        %s249 = scalar_lea.vmem %s3, %s248
        %p250 = pneg %p139
        %p251 = pneg %p136
        %s252 = smul.u32 32, %s24
        %p253 = scmp.lt.s32.totalorder %s252, 63
        %s254 = scalar_select %p253, %s252, 63
        %s255 = smul.addr %s254, 4
        %s256 = scalar_lea.vmem %s4, %s255
        %p257 = pneg %p165
        %p258 = pneg %p162
        %s259 = sand.u32 %s152, 1
        %s260 = scalar_lea.sflag [#allocation3], %s259
        %s261 = sand.u32 %s152, 1
        %s262 = scalar_lea.vmem [#allocation2], %s261
        %p263 = pneg %p191
        %p264 = pneg %p188
        %s265 = sand.u32 %s178, 1
        %s266 = scalar_lea.sflag [#allocation5], %s265
        %s267 = sand.u32 %s178, 1
        %s268 = scalar_lea.vmem [#allocation4], %s267
        %s269 = smul.u32 32, %s24
        %p270 = scmp.lt.s32.totalorder %s269, 63
        %s271 = scalar_select %p270, %s269, 63
        %s272 = smul.addr %s271, 8
        %s273 = scalar_lea.vmem %s0, %s272
        %s274 = smul.u32 32, %s24
        %s275 = smul.u32 32, %s24
        %p276 = scmp.lt.s32.totalorder %s275, 63
        %s277 = scalar_select %p276, %s275, 63
        %s278 = smul.addr %s277, 4
        %s279 = scalar_lea.vmem %s3, %s278
        %s280 = smul.u32 32, %s24
        %s281 = smul.u32 32, %s24
        %p282 = scmp.lt.s32.totalorder %s281, 63
        %s283 = scalar_select %p282, %s281, 63
        %s284 = smul.addr %s283, 4
        %s285 = scalar_lea.vmem %s4, %s284
        %s286 = smul.u32 32, %s24
        %v288 = vld [vmem:[%s273] sm:$0xff]
        %v289 = vld [vmem:[%s273 + $0x8] sm:$0xff]
        %v290 = vld [vmem:[%s273 + $0x10] sm:$0xff]
        %v291 = vld [vmem:[%s273 + $0x18] sm:$0xff]
        %v292 = vld [vmem:[%s273 + $0x20] sm:$0xff]
        %v293 = vld [vmem:[%s273 + $0x28] sm:$0xff]
        %v294 = vld [vmem:[%s273 + $0x30] sm:$0xff]
        %v295 = vld [vmem:[%s273 + $0x38] sm:$0xff]
        %v296 = vld [vmem:[%s273 + $0x40] sm:$0xff]
        %v297 = vld [vmem:[%s273 + $0x48] sm:$0xff]
        %v298 = vld [vmem:[%s273 + $0x50] sm:$0xff]
        %v299 = vld [vmem:[%s273 + $0x58] sm:$0xff]
        %v300 = vld [vmem:[%s273 + $0x60] sm:$0xff]
        %v301 = vld [vmem:[%s273 + $0x68] sm:$0xff]
        %v302 = vld [vmem:[%s273 + $0x70] sm:$0xff]
        %v303 = vld [vmem:[%s273 + $0x78] sm:$0xff]
        %v304 = vld [vmem:[%s273 + $0x80] sm:$0xff]
        %v305 = vld [vmem:[%s273 + $0x88] sm:$0xff]
        %v306 = vld [vmem:[%s273 + $0x90] sm:$0xff]
        %v307 = vld [vmem:[%s273 + $0x98] sm:$0xff]
        %v308 = vld [vmem:[%s273 + $0xa0] sm:$0xff]
        %v309 = vld [vmem:[%s273 + $0xa8] sm:$0xff]
        %v310 = vld [vmem:[%s273 + $0xb0] sm:$0xff]
        %v311 = vld [vmem:[%s273 + $0xb8] sm:$0xff]
        %v312 = vld [vmem:[%s273 + $0xc0] sm:$0xff]
        %v313 = vld [vmem:[%s273 + $0xc8] sm:$0xff]
        %v314 = vld [vmem:[%s273 + $0xd0] sm:$0xff]
        %v315 = vld [vmem:[%s273 + $0xd8] sm:$0xff]
        %v316 = vld [vmem:[%s273 + $0xe0] sm:$0xff]
        %v317 = vld [vmem:[%s273 + $0xe8] sm:$0xff]
        %v318 = vld [vmem:[%s273 + $0xf0] sm:$0xff]
        %v319 = vld [vmem:[%s273 + $0xf8] sm:$0xff]
        %v320 = vpack.c.bf16 %v289, %v288
        %v321 = vpack.c.bf16 %v291, %v290
        %v322 = vpack.c.bf16 %v293, %v292
        %v323 = vpack.c.bf16 %v295, %v294
        %v324 = vpack.c.bf16 %v297, %v296
        %v325 = vpack.c.bf16 %v299, %v298
        %v326 = vpack.c.bf16 %v301, %v300
        %v327 = vpack.c.bf16 %v303, %v302
        %v328 = vpack.c.bf16 %v305, %v304
        %v329 = vpack.c.bf16 %v307, %v306
        %v330 = vpack.c.bf16 %v309, %v308
        %v331 = vpack.c.bf16 %v311, %v310
        %v332 = vpack.c.bf16 %v313, %v312
        %v333 = vpack.c.bf16 %v315, %v314
        %v334 = vpack.c.bf16 %v317, %v316
        %v335 = vpack.c.bf16 %v319, %v318
        %v336 = vld [vmem:[%s1] sm:$0x3]
        %vm337 = vcmask 31744
        %v339 = vsel %vm337, %v320, 0
        %v342 = vsel %vm337, %v321, 0
        %v345 = vsel %vm337, %v322, 0
        %v348 = vsel %vm337, %v323, 0
        %v351 = vsel %vm337, %v324, 0
        %v354 = vsel %vm337, %v325, 0
        %v357 = vsel %vm337, %v326, 0
        %v360 = vsel %vm337, %v327, 0
        %v363 = vsel %vm337, %v328, 0
        %v366 = vsel %vm337, %v329, 0
        %v369 = vsel %vm337, %v330, 0
        %v372 = vsel %vm337, %v331, 0
        %v375 = vsel %vm337, %v332, 0
        %v378 = vsel %vm337, %v333, 0
        %v381 = vsel %vm337, %v334, 0
        %v384 = vsel %vm337, %v335, 0
        %vm386 = vcmask 1041408
        %v388 = vsel %vm386, %v336, 0
        %390 = vmatpush.bf16.msra.mxu0 0
        %391 = vmatpush.bf16.msra.mxu0 0
        %392 = vmatpush.bf16.msra.mxu0 0
        %393 = vmatpush.bf16.msra.mxu0 0
        %394 = vmatpush.bf16.msra.mxu0 0
        %395 = vmatpush.bf16.msra.mxu0 0
        %396 = vmatpush.bf16.msra.mxu0 0
        %397 = vmatpush.bf16.msra.mxu0 %v388
        %398 = vmatmul.bf16.gmra.mxu0 %v339
        %v399 = vpop.f32.mrf.mxu0
        %v400 = vadd.f32 0.0, %v399
        %v401 = vpop.f32.mrf.mxu0
        %v402 = vadd.f32 0.0, %v401
        %403 = vmatmul.bf16.gmra.mxu0 %v342
        %v404 = vpop.f32.mrf.mxu0
        %v405 = vadd.f32 0.0, %v404
        %v406 = vpop.f32.mrf.mxu0
        %v407 = vadd.f32 0.0, %v406
        %408 = vmatmul.bf16.gmra.mxu0 %v345
        %v409 = vpop.f32.mrf.mxu0
        %v410 = vadd.f32 0.0, %v409
        %v411 = vpop.f32.mrf.mxu0
        %v412 = vadd.f32 0.0, %v411
        %413 = vmatmul.bf16.gmra.mxu0 %v348
        %v414 = vpop.f32.mrf.mxu0
        %v415 = vadd.f32 0.0, %v414
        %v416 = vpop.f32.mrf.mxu0
        %v417 = vadd.f32 0.0, %v416
        %418 = vmatmul.bf16.gmra.mxu0 %v351
        %v419 = vpop.f32.mrf.mxu0
        %v420 = vadd.f32 0.0, %v419
        %v421 = vpop.f32.mrf.mxu0
        %v422 = vadd.f32 0.0, %v421
        %423 = vmatmul.bf16.gmra.mxu0 %v354
        %v424 = vpop.f32.mrf.mxu0
        %v425 = vadd.f32 0.0, %v424
        %v426 = vpop.f32.mrf.mxu0
        %v427 = vadd.f32 0.0, %v426
        %428 = vmatmul.bf16.gmra.mxu0 %v357
        %v429 = vpop.f32.mrf.mxu0
        %v430 = vadd.f32 0.0, %v429
        %v431 = vpop.f32.mrf.mxu0
        %v432 = vadd.f32 0.0, %v431
        %433 = vmatmul.bf16.gmra.mxu0 %v360
        %v434 = vpop.f32.mrf.mxu0
        %v435 = vadd.f32 0.0, %v434
        %v436 = vpop.f32.mrf.mxu0
        %v437 = vadd.f32 0.0, %v436
        %438 = vmatmul.bf16.gmra.mxu0 %v363
        %v439 = vpop.f32.mrf.mxu0
        %v440 = vadd.f32 0.0, %v439
        %v441 = vpop.f32.mrf.mxu0
        %v442 = vadd.f32 0.0, %v441
        %443 = vmatmul.bf16.gmra.mxu0 %v366
        %v444 = vpop.f32.mrf.mxu0
        %v445 = vadd.f32 0.0, %v444
        %v446 = vpop.f32.mrf.mxu0
        %v447 = vadd.f32 0.0, %v446
        %448 = vmatmul.bf16.gmra.mxu0 %v369
        %v449 = vpop.f32.mrf.mxu0
        %v450 = vadd.f32 0.0, %v449
        %v451 = vpop.f32.mrf.mxu0
        %v452 = vadd.f32 0.0, %v451
        %453 = vmatmul.bf16.gmra.mxu0 %v372
        %v454 = vpop.f32.mrf.mxu0
        %v455 = vadd.f32 0.0, %v454
        %v456 = vpop.f32.mrf.mxu0
        %v457 = vadd.f32 0.0, %v456
        %458 = vmatmul.bf16.gmra.mxu0 %v375
        %v459 = vpop.f32.mrf.mxu0
        %v460 = vadd.f32 0.0, %v459
        %v461 = vpop.f32.mrf.mxu0
        %v462 = vadd.f32 0.0, %v461
        %463 = vmatmul.bf16.gmra.mxu0 %v378
        %v464 = vpop.f32.mrf.mxu0
        %v465 = vadd.f32 0.0, %v464
        %v466 = vpop.f32.mrf.mxu0
        %v467 = vadd.f32 0.0, %v466
        %468 = vmatmul.bf16.gmra.mxu0 %v381
        %v469 = vpop.f32.mrf.mxu0
        %v470 = vadd.f32 0.0, %v469
        %v471 = vpop.f32.mrf.mxu0
        %v472 = vadd.f32 0.0, %v471
        %473 = vmatmul.bf16.gmra.mxu0 %v384
        %v474 = vpop.f32.mrf.mxu0
        %v475 = vadd.f32 0.0, %v474
        %v476 = vpop.f32.mrf.mxu0
        %v477 = vadd.f32 0.0, %v476
        %478 = vdwg.mxu0
        %v479 = vsel %vm337, %v400, 0.0
        %v480 = vsel %vm337, %v402, 0.0
        %v481 = vadd.f32 %v479, %v480
        %v482 = vsel %vm337, %v405, 0.0
        %v483 = vadd.f32 %v481, %v482
        %v484 = vsel %vm337, %v407, 0.0
        %v485 = vadd.f32 %v483, %v484
        %v486 = vsel %vm337, %v410, 0.0
        %v487 = vadd.f32 %v485, %v486
        %v488 = vsel %vm337, %v412, 0.0
        %v489 = vadd.f32 %v487, %v488
        %v490 = vsel %vm337, %v415, 0.0
        %v491 = vadd.f32 %v489, %v490
        %v492 = vsel %vm337, %v417, 0.0
        %v493 = vadd.f32 %v491, %v492
        %v494 = vsel %vm337, %v420, 0.0
        %v495 = vadd.f32 %v493, %v494
        %v496 = vsel %vm337, %v422, 0.0
        %v497 = vadd.f32 %v495, %v496
        %v498 = vsel %vm337, %v425, 0.0
        %v499 = vadd.f32 %v497, %v498
        %v500 = vsel %vm337, %v427, 0.0
        %v501 = vadd.f32 %v499, %v500
        %v502 = vsel %vm337, %v430, 0.0
        %v503 = vadd.f32 %v501, %v502
        %v504 = vsel %vm337, %v432, 0.0
        %v505 = vadd.f32 %v503, %v504
        %v506 = vsel %vm337, %v435, 0.0
        %v507 = vadd.f32 %v505, %v506
        %v508 = vsel %vm337, %v437, 0.0
        %v509 = vadd.f32 %v507, %v508
        %v510 = vsel %vm337, %v440, 0.0
        %v511 = vadd.f32 %v509, %v510
        %v512 = vsel %vm337, %v442, 0.0
        %v513 = vadd.f32 %v511, %v512
        %v514 = vsel %vm337, %v445, 0.0
        %v515 = vadd.f32 %v513, %v514
        %v516 = vsel %vm337, %v447, 0.0
        %v517 = vadd.f32 %v515, %v516
        %v518 = vsel %vm337, %v450, 0.0
        %v519 = vadd.f32 %v517, %v518
        %v520 = vsel %vm337, %v452, 0.0
        %v521 = vadd.f32 %v519, %v520
        %v522 = vsel %vm337, %v455, 0.0
        %v523 = vadd.f32 %v521, %v522
        %v524 = vsel %vm337, %v457, 0.0
        %v525 = vadd.f32 %v523, %v524
        %v526 = vsel %vm337, %v460, 0.0
        %v527 = vadd.f32 %v525, %v526
        %v528 = vsel %vm337, %v462, 0.0
        %v529 = vadd.f32 %v527, %v528
        %v530 = vsel %vm337, %v465, 0.0
        %v531 = vadd.f32 %v529, %v530
        %v532 = vsel %vm337, %v467, 0.0
        %v533 = vadd.f32 %v531, %v532
        %v534 = vsel %vm337, %v470, 0.0
        %v535 = vadd.f32 %v533, %v534
        %v536 = vsel %vm337, %v472, 0.0
        %v537 = vadd.f32 %v535, %v536
        %v538 = vsel %vm337, %v475, 0.0
        %v539 = vadd.f32 %v537, %v538
        %v540 = vsel %vm337, %v477, 0.0
        %v541 = vadd.f32 %v539, %v540
        %v542 = vrot.slane %v541, 4
        %v543 = vadd.f32 %v541, %v542
        %v544 = vrot.slane %v543, 2
        %v545 = vadd.f32 %v543, %v544
        %v546 = vrot.slane %v545, 1
        %v547 = vadd.f32 %v545, %v546
        %v548 = vmul.f32 %v400, %v400
        %v549 = vmul.f32 %v402, %v402
        %v550 = vmul.f32 %v405, %v405
        %v551 = vmul.f32 %v407, %v407
        %v552 = vmul.f32 %v410, %v410
        %v553 = vmul.f32 %v412, %v412
        %v554 = vmul.f32 %v415, %v415
        %v555 = vmul.f32 %v417, %v417
        %v556 = vmul.f32 %v420, %v420
        %v557 = vmul.f32 %v422, %v422
        %v558 = vmul.f32 %v425, %v425
        %v559 = vmul.f32 %v427, %v427
        %v560 = vmul.f32 %v430, %v430
        %v561 = vmul.f32 %v432, %v432
        %v562 = vmul.f32 %v435, %v435
        %v563 = vmul.f32 %v437, %v437
        %v564 = vmul.f32 %v440, %v440
        %v565 = vmul.f32 %v442, %v442
        %v566 = vmul.f32 %v445, %v445
        %v567 = vmul.f32 %v447, %v447
        %v568 = vmul.f32 %v450, %v450
        %v569 = vmul.f32 %v452, %v452
        %v570 = vmul.f32 %v455, %v455
        %v571 = vmul.f32 %v457, %v457
        %v572 = vmul.f32 %v460, %v460
        %v573 = vmul.f32 %v462, %v462
        %v574 = vmul.f32 %v465, %v465
        %v575 = vmul.f32 %v467, %v467
        %v576 = vmul.f32 %v470, %v470
        %v577 = vmul.f32 %v472, %v472
        %v578 = vmul.f32 %v475, %v475
        %v579 = vmul.f32 %v477, %v477
        %v580 = vsel %vm337, %v548, 0.0
        %v581 = vsel %vm337, %v549, 0.0
        %v582 = vadd.f32 %v580, %v581
        %v583 = vsel %vm337, %v550, 0.0
        %v584 = vadd.f32 %v582, %v583
        %v585 = vsel %vm337, %v551, 0.0
        %v586 = vadd.f32 %v584, %v585
        %v587 = vsel %vm337, %v552, 0.0
        %v588 = vadd.f32 %v586, %v587
        %v589 = vsel %vm337, %v553, 0.0
        %v590 = vadd.f32 %v588, %v589
        %v591 = vsel %vm337, %v554, 0.0
        %v592 = vadd.f32 %v590, %v591
        %v593 = vsel %vm337, %v555, 0.0
        %v594 = vadd.f32 %v592, %v593
        %v595 = vsel %vm337, %v556, 0.0
        %v596 = vadd.f32 %v594, %v595
        %v597 = vsel %vm337, %v557, 0.0
        %v598 = vadd.f32 %v596, %v597
        %v599 = vsel %vm337, %v558, 0.0
        %v600 = vadd.f32 %v598, %v599
        %v601 = vsel %vm337, %v559, 0.0
        %v602 = vadd.f32 %v600, %v601
        %v603 = vsel %vm337, %v560, 0.0
        %v604 = vadd.f32 %v602, %v603
        %v605 = vsel %vm337, %v561, 0.0
        %v606 = vadd.f32 %v604, %v605
        %v607 = vsel %vm337, %v562, 0.0
        %v608 = vadd.f32 %v606, %v607
        %v609 = vsel %vm337, %v563, 0.0
        %v610 = vadd.f32 %v608, %v609
        %v611 = vsel %vm337, %v564, 0.0
        %v612 = vadd.f32 %v610, %v611
        %v613 = vsel %vm337, %v565, 0.0
        %v614 = vadd.f32 %v612, %v613
        %v615 = vsel %vm337, %v566, 0.0
        %v616 = vadd.f32 %v614, %v615
        %v617 = vsel %vm337, %v567, 0.0
        %v618 = vadd.f32 %v616, %v617
        %v619 = vsel %vm337, %v568, 0.0
        %v620 = vadd.f32 %v618, %v619
        %v621 = vsel %vm337, %v569, 0.0
        %v622 = vadd.f32 %v620, %v621
        %v623 = vsel %vm337, %v570, 0.0
        %v624 = vadd.f32 %v622, %v623
        %v625 = vsel %vm337, %v571, 0.0
        %v626 = vadd.f32 %v624, %v625
        %v627 = vsel %vm337, %v572, 0.0
        %v628 = vadd.f32 %v626, %v627
        %v629 = vsel %vm337, %v573, 0.0
        %v630 = vadd.f32 %v628, %v629
        %v631 = vsel %vm337, %v574, 0.0
        %v632 = vadd.f32 %v630, %v631
        %v633 = vsel %vm337, %v575, 0.0
        %v634 = vadd.f32 %v632, %v633
        %v635 = vsel %vm337, %v576, 0.0
        %v636 = vadd.f32 %v634, %v635
        %v637 = vsel %vm337, %v577, 0.0
        %v638 = vadd.f32 %v636, %v637
        %v639 = vsel %vm337, %v578, 0.0
        %v640 = vadd.f32 %v638, %v639
        %v641 = vsel %vm337, %v579, 0.0
        %v642 = vadd.f32 %v640, %v641
        %v643 = vrot.slane %v642, 4
        %v644 = vadd.f32 %v642, %v643
        %v645 = vrot.slane %v644, 2
        %v646 = vadd.f32 %v644, %v645
        %v647 = vrot.slane %v646, 1
        %v648 = vadd.f32 %v646, %v647
        %650 = vrot.lane.b32.xlu0 %v648, 4
        %v651 = vpop.permute.xlu0 %650
        %v653 = vsel %vm337, %v547, %v651
        %vm654 = vcmask 57344
        %655 = vst.msk [vmem:[%s262] sm:$0x1] %vm654, %v653
        %v656 = vpack.c.bf16 %v400, %v400
        %v657 = vpack.c.bf16 %v402, %v402
        %v658 = vpack.c.bf16 %v405, %v405
        %v659 = vpack.c.bf16 %v407, %v407
        %v660 = vpack.c.bf16 %v410, %v410
        %v661 = vpack.c.bf16 %v412, %v412
        %v662 = vpack.c.bf16 %v415, %v415
        %v663 = vpack.c.bf16 %v417, %v417
        %v664 = vpack.c.bf16 %v420, %v420
        %v665 = vpack.c.bf16 %v422, %v422
        %v666 = vpack.c.bf16 %v425, %v425
        %v667 = vpack.c.bf16 %v427, %v427
        %v668 = vpack.c.bf16 %v430, %v430
        %v669 = vpack.c.bf16 %v432, %v432
        %v670 = vpack.c.bf16 %v435, %v435
        %v671 = vpack.c.bf16 %v437, %v437
        %v672 = vpack.c.bf16 %v440, %v440
        %v673 = vpack.c.bf16 %v442, %v442
        %v674 = vpack.c.bf16 %v445, %v445
        %v675 = vpack.c.bf16 %v447, %v447
        %v676 = vpack.c.bf16 %v450, %v450
        %v677 = vpack.c.bf16 %v452, %v452
        %v678 = vpack.c.bf16 %v455, %v455
        %v679 = vpack.c.bf16 %v457, %v457
        %v680 = vpack.c.bf16 %v460, %v460
        %v681 = vpack.c.bf16 %v462, %v462
        %v682 = vpack.c.bf16 %v465, %v465
        %v683 = vpack.c.bf16 %v467, %v467
        %v684 = vpack.c.bf16 %v470, %v470
        %v685 = vpack.c.bf16 %v472, %v472
        %v686 = vpack.c.bf16 %v475, %v475
        %v687 = vpack.c.bf16 %v477, %v477
        %vm688 = vcmask 27648
        %689 = vst.msk [vmem:[%s279] sm:$0xf] %vm688, %v656
        %690 = vst.msk [vmem:[%s279 + $0x4] sm:$0xf] %vm688, %v657
        %691 = vst.msk [vmem:[%s279 + $0x8] sm:$0xf] %vm688, %v658
        %692 = vst.msk [vmem:[%s279 + $0xc] sm:$0xf] %vm688, %v659
        %693 = vst.msk [vmem:[%s279 + $0x10] sm:$0xf] %vm688, %v660
        %694 = vst.msk [vmem:[%s279 + $0x14] sm:$0xf] %vm688, %v661
        %695 = vst.msk [vmem:[%s279 + $0x18] sm:$0xf] %vm688, %v662
        %696 = vst.msk [vmem:[%s279 + $0x1c] sm:$0xf] %vm688, %v663
        %697 = vst.msk [vmem:[%s279 + $0x20] sm:$0xf] %vm688, %v664
        %698 = vst.msk [vmem:[%s279 + $0x24] sm:$0xf] %vm688, %v665
        %699 = vst.msk [vmem:[%s279 + $0x28] sm:$0xf] %vm688, %v666
        %700 = vst.msk [vmem:[%s279 + $0x2c] sm:$0xf] %vm688, %v667
        %701 = vst.msk [vmem:[%s279 + $0x30] sm:$0xf] %vm688, %v668
        %702 = vst.msk [vmem:[%s279 + $0x34] sm:$0xf] %vm688, %v669
        %703 = vst.msk [vmem:[%s279 + $0x38] sm:$0xf] %vm688, %v670
        %704 = vst.msk [vmem:[%s279 + $0x3c] sm:$0xf] %vm688, %v671
        %705 = vst.msk [vmem:[%s279 + $0x40] sm:$0xf] %vm688, %v672
        %706 = vst.msk [vmem:[%s279 + $0x44] sm:$0xf] %vm688, %v673
        %707 = vst.msk [vmem:[%s279 + $0x48] sm:$0xf] %vm688, %v674
        %708 = vst.msk [vmem:[%s279 + $0x4c] sm:$0xf] %vm688, %v675
        %709 = vst.msk [vmem:[%s279 + $0x50] sm:$0xf] %vm688, %v676
        %710 = vst.msk [vmem:[%s279 + $0x54] sm:$0xf] %vm688, %v677
        %711 = vst.msk [vmem:[%s279 + $0x58] sm:$0xf] %vm688, %v678
        %712 = vst.msk [vmem:[%s279 + $0x5c] sm:$0xf] %vm688, %v679
        %713 = vst.msk [vmem:[%s279 + $0x60] sm:$0xf] %vm688, %v680
        %714 = vst.msk [vmem:[%s279 + $0x64] sm:$0xf] %vm688, %v681
        %715 = vst.msk [vmem:[%s279 + $0x68] sm:$0xf] %vm688, %v682
        %716 = vst.msk [vmem:[%s279 + $0x6c] sm:$0xf] %vm688, %v683
        %717 = vst.msk [vmem:[%s279 + $0x70] sm:$0xf] %vm688, %v684
        %718 = vst.msk [vmem:[%s279 + $0x74] sm:$0xf] %vm688, %v685
        %719 = vst.msk [vmem:[%s279 + $0x78] sm:$0xf] %vm688, %v686
        %720 = vst.msk [vmem:[%s279 + $0x7c] sm:$0xf] %vm688, %v687
        %v721 = vld [vmem:[%s2] sm:$0x3]
        %v723 = vsel %vm386, %v721, 0
        %725 = vmatpush.bf16.msra.mxu0 0
        %726 = vmatpush.bf16.msra.mxu0 0
        %727 = vmatpush.bf16.msra.mxu0 0
        %728 = vmatpush.bf16.msra.mxu0 0
        %729 = vmatpush.bf16.msra.mxu0 0
        %730 = vmatpush.bf16.msra.mxu0 0
        %731 = vmatpush.bf16.msra.mxu0 0
        %732 = vmatpush.bf16.msra.mxu0 %v723
        %733 = vmatmul.bf16.gmra.mxu0 %v339
        %v734 = vpop.f32.mrf.mxu0
        %v735 = vadd.f32 0.0, %v734
        %v736 = vpop.f32.mrf.mxu0
        %v737 = vadd.f32 0.0, %v736
        %738 = vmatmul.bf16.gmra.mxu0 %v342
        %v739 = vpop.f32.mrf.mxu0
        %v740 = vadd.f32 0.0, %v739
        %v741 = vpop.f32.mrf.mxu0
        %v742 = vadd.f32 0.0, %v741
        %743 = vmatmul.bf16.gmra.mxu0 %v345
        %v744 = vpop.f32.mrf.mxu0
        %v745 = vadd.f32 0.0, %v744
        %v746 = vpop.f32.mrf.mxu0
        %v747 = vadd.f32 0.0, %v746
        %748 = vmatmul.bf16.gmra.mxu0 %v348
        %v749 = vpop.f32.mrf.mxu0
        %v750 = vadd.f32 0.0, %v749
        %v751 = vpop.f32.mrf.mxu0
        %v752 = vadd.f32 0.0, %v751
        %753 = vmatmul.bf16.gmra.mxu0 %v351
        %v754 = vpop.f32.mrf.mxu0
        %v755 = vadd.f32 0.0, %v754
        %v756 = vpop.f32.mrf.mxu0
        %v757 = vadd.f32 0.0, %v756
        %758 = vmatmul.bf16.gmra.mxu0 %v354
        %v759 = vpop.f32.mrf.mxu0
        %v760 = vadd.f32 0.0, %v759
        %v761 = vpop.f32.mrf.mxu0
        %v762 = vadd.f32 0.0, %v761
        %763 = vmatmul.bf16.gmra.mxu0 %v357
        %v764 = vpop.f32.mrf.mxu0
        %v765 = vadd.f32 0.0, %v764
        %v766 = vpop.f32.mrf.mxu0
        %v767 = vadd.f32 0.0, %v766
        %768 = vmatmul.bf16.gmra.mxu0 %v360
        %v769 = vpop.f32.mrf.mxu0
        %v770 = vadd.f32 0.0, %v769
        %v771 = vpop.f32.mrf.mxu0
        %v772 = vadd.f32 0.0, %v771
        %773 = vmatmul.bf16.gmra.mxu0 %v363
        %v774 = vpop.f32.mrf.mxu0
        %v775 = vadd.f32 0.0, %v774
        %v776 = vpop.f32.mrf.mxu0
        %v777 = vadd.f32 0.0, %v776
        %778 = vmatmul.bf16.gmra.mxu0 %v366
        %v779 = vpop.f32.mrf.mxu0
        %v780 = vadd.f32 0.0, %v779
        %v781 = vpop.f32.mrf.mxu0
        %v782 = vadd.f32 0.0, %v781
        %783 = vmatmul.bf16.gmra.mxu0 %v369
        %v784 = vpop.f32.mrf.mxu0
        %v785 = vadd.f32 0.0, %v784
        %v786 = vpop.f32.mrf.mxu0
        %v787 = vadd.f32 0.0, %v786
        %788 = vmatmul.bf16.gmra.mxu0 %v372
        %v789 = vpop.f32.mrf.mxu0
        %v790 = vadd.f32 0.0, %v789
        %v791 = vpop.f32.mrf.mxu0
        %v792 = vadd.f32 0.0, %v791
        %793 = vmatmul.bf16.gmra.mxu0 %v375
        %v794 = vpop.f32.mrf.mxu0
        %v795 = vadd.f32 0.0, %v794
        %v796 = vpop.f32.mrf.mxu0
        %v797 = vadd.f32 0.0, %v796
        %798 = vmatmul.bf16.gmra.mxu0 %v378
        %v799 = vpop.f32.mrf.mxu0
        %v800 = vadd.f32 0.0, %v799
        %v801 = vpop.f32.mrf.mxu0
        %v802 = vadd.f32 0.0, %v801
        %803 = vmatmul.bf16.gmra.mxu0 %v381
        %v804 = vpop.f32.mrf.mxu0
        %v805 = vadd.f32 0.0, %v804
        %v806 = vpop.f32.mrf.mxu0
        %v807 = vadd.f32 0.0, %v806
        %808 = vmatmul.bf16.gmra.mxu0 %v384
        %v809 = vpop.f32.mrf.mxu0
        %v810 = vadd.f32 0.0, %v809
        %v811 = vpop.f32.mrf.mxu0
        %v812 = vadd.f32 0.0, %v811
        %813 = vdwg.mxu0
        %vm814 = vcmask 130048
        %v815 = vsel %vm814, %v735, 0.0
        %v816 = vsel %vm814, %v737, 0.0
        %v817 = vadd.f32 %v815, %v816
        %v818 = vsel %vm814, %v740, 0.0
        %v819 = vadd.f32 %v817, %v818
        %v820 = vsel %vm814, %v742, 0.0
        %v821 = vadd.f32 %v819, %v820
        %v822 = vsel %vm814, %v745, 0.0
        %v823 = vadd.f32 %v821, %v822
        %v824 = vsel %vm814, %v747, 0.0
        %v825 = vadd.f32 %v823, %v824
        %v826 = vsel %vm814, %v750, 0.0
        %v827 = vadd.f32 %v825, %v826
        %v828 = vsel %vm814, %v752, 0.0
        %v829 = vadd.f32 %v827, %v828
        %v830 = vsel %vm814, %v755, 0.0
        %v831 = vadd.f32 %v829, %v830
        %v832 = vsel %vm814, %v757, 0.0
        %v833 = vadd.f32 %v831, %v832
        %v834 = vsel %vm814, %v760, 0.0
        %v835 = vadd.f32 %v833, %v834
        %v836 = vsel %vm814, %v762, 0.0
        %v837 = vadd.f32 %v835, %v836
        %v838 = vsel %vm814, %v765, 0.0
        %v839 = vadd.f32 %v837, %v838
        %v840 = vsel %vm814, %v767, 0.0
        %v841 = vadd.f32 %v839, %v840
        %v842 = vsel %vm814, %v770, 0.0
        %v843 = vadd.f32 %v841, %v842
        %v844 = vsel %vm814, %v772, 0.0
        %v845 = vadd.f32 %v843, %v844
        %v846 = vsel %vm814, %v775, 0.0
        %v847 = vadd.f32 %v845, %v846
        %v848 = vsel %vm814, %v777, 0.0
        %v849 = vadd.f32 %v847, %v848
        %v850 = vsel %vm814, %v780, 0.0
        %v851 = vadd.f32 %v849, %v850
        %v852 = vsel %vm814, %v782, 0.0
        %v853 = vadd.f32 %v851, %v852
        %v854 = vsel %vm814, %v785, 0.0
        %v855 = vadd.f32 %v853, %v854
        %v856 = vsel %vm814, %v787, 0.0
        %v857 = vadd.f32 %v855, %v856
        %v858 = vsel %vm814, %v790, 0.0
        %v859 = vadd.f32 %v857, %v858
        %v860 = vsel %vm814, %v792, 0.0
        %v861 = vadd.f32 %v859, %v860
        %v862 = vsel %vm814, %v795, 0.0
        %v863 = vadd.f32 %v861, %v862
        %v864 = vsel %vm814, %v797, 0.0
        %v865 = vadd.f32 %v863, %v864
        %v866 = vsel %vm814, %v800, 0.0
        %v867 = vadd.f32 %v865, %v866
        %v868 = vsel %vm814, %v802, 0.0
        %v869 = vadd.f32 %v867, %v868
        %v870 = vsel %vm814, %v805, 0.0
        %v871 = vadd.f32 %v869, %v870
        %v872 = vsel %vm814, %v807, 0.0
        %v873 = vadd.f32 %v871, %v872
        %v874 = vsel %vm814, %v810, 0.0
        %v875 = vadd.f32 %v873, %v874
        %v876 = vsel %vm814, %v812, 0.0
        %v877 = vadd.f32 %v875, %v876
        %v878 = vrot.slane %v877, 4
        %v879 = vadd.f32 %v877, %v878
        %v880 = vrot.slane %v879, 2
        %v881 = vadd.f32 %v879, %v880
        %v882 = vrot.slane %v881, 1
        %v883 = vadd.f32 %v881, %v882
        %v884 = vmul.f32 %v735, %v735
        %v885 = vmul.f32 %v737, %v737
        %v886 = vmul.f32 %v740, %v740
        %v887 = vmul.f32 %v742, %v742
        %v888 = vmul.f32 %v745, %v745
        %v889 = vmul.f32 %v747, %v747
        %v890 = vmul.f32 %v750, %v750
        %v891 = vmul.f32 %v752, %v752
        %v892 = vmul.f32 %v755, %v755
        %v893 = vmul.f32 %v757, %v757
        %v894 = vmul.f32 %v760, %v760
        %v895 = vmul.f32 %v762, %v762
        %v896 = vmul.f32 %v765, %v765
        %v897 = vmul.f32 %v767, %v767
        %v898 = vmul.f32 %v770, %v770
        %v899 = vmul.f32 %v772, %v772
        %v900 = vmul.f32 %v775, %v775
        %v901 = vmul.f32 %v777, %v777
        %v902 = vmul.f32 %v780, %v780
        %v903 = vmul.f32 %v782, %v782
        %v904 = vmul.f32 %v785, %v785
        %v905 = vmul.f32 %v787, %v787
        %v906 = vmul.f32 %v790, %v790
        %v907 = vmul.f32 %v792, %v792
        %v908 = vmul.f32 %v795, %v795
        %v909 = vmul.f32 %v797, %v797
        %v910 = vmul.f32 %v800, %v800
        %v911 = vmul.f32 %v802, %v802
        %v912 = vmul.f32 %v805, %v805
        %v913 = vmul.f32 %v807, %v807
        %v914 = vmul.f32 %v810, %v810
        %v915 = vmul.f32 %v812, %v812
        %v916 = vsel %vm814, %v884, 0.0
        %v917 = vsel %vm814, %v885, 0.0
        %v918 = vadd.f32 %v916, %v917
        %v919 = vsel %vm814, %v886, 0.0
        %v920 = vadd.f32 %v918, %v919
        %v921 = vsel %vm814, %v887, 0.0
        %v922 = vadd.f32 %v920, %v921
        %v923 = vsel %vm814, %v888, 0.0
        %v924 = vadd.f32 %v922, %v923
        %v925 = vsel %vm814, %v889, 0.0
        %v926 = vadd.f32 %v924, %v925
        %v927 = vsel %vm814, %v890, 0.0
        %v928 = vadd.f32 %v926, %v927
        %v929 = vsel %vm814, %v891, 0.0
        %v930 = vadd.f32 %v928, %v929
        %v931 = vsel %vm814, %v892, 0.0
        %v932 = vadd.f32 %v930, %v931
        %v933 = vsel %vm814, %v893, 0.0
        %v934 = vadd.f32 %v932, %v933
        %v935 = vsel %vm814, %v894, 0.0
        %v936 = vadd.f32 %v934, %v935
        %v937 = vsel %vm814, %v895, 0.0
        %v938 = vadd.f32 %v936, %v937
        %v939 = vsel %vm814, %v896, 0.0
        %v940 = vadd.f32 %v938, %v939
        %v941 = vsel %vm814, %v897, 0.0
        %v942 = vadd.f32 %v940, %v941
        %v943 = vsel %vm814, %v898, 0.0
        %v944 = vadd.f32 %v942, %v943
        %v945 = vsel %vm814, %v899, 0.0
        %v946 = vadd.f32 %v944, %v945
        %v947 = vsel %vm814, %v900, 0.0
        %v948 = vadd.f32 %v946, %v947
        %v949 = vsel %vm814, %v901, 0.0
        %v950 = vadd.f32 %v948, %v949
        %v951 = vsel %vm814, %v902, 0.0
        %v952 = vadd.f32 %v950, %v951
        %v953 = vsel %vm814, %v903, 0.0
        %v954 = vadd.f32 %v952, %v953
        %v955 = vsel %vm814, %v904, 0.0
        %v956 = vadd.f32 %v954, %v955
        %v957 = vsel %vm814, %v905, 0.0
        %v958 = vadd.f32 %v956, %v957
        %v959 = vsel %vm814, %v906, 0.0
        %v960 = vadd.f32 %v958, %v959
        %v961 = vsel %vm814, %v907, 0.0
        %v962 = vadd.f32 %v960, %v961
        %v963 = vsel %vm814, %v908, 0.0
        %v964 = vadd.f32 %v962, %v963
        %v965 = vsel %vm814, %v909, 0.0
        %v966 = vadd.f32 %v964, %v965
        %v967 = vsel %vm814, %v910, 0.0
        %v968 = vadd.f32 %v966, %v967
        %v969 = vsel %vm814, %v911, 0.0
        %v970 = vadd.f32 %v968, %v969
        %v971 = vsel %vm814, %v912, 0.0
        %v972 = vadd.f32 %v970, %v971
        %v973 = vsel %vm814, %v913, 0.0
        %v974 = vadd.f32 %v972, %v973
        %v975 = vsel %vm814, %v914, 0.0
        %v976 = vadd.f32 %v974, %v975
        %v977 = vsel %vm814, %v915, 0.0
        %v978 = vadd.f32 %v976, %v977
        %v979 = vrot.slane %v978, 4
        %v980 = vadd.f32 %v978, %v979
        %v981 = vrot.slane %v980, 2
        %v982 = vadd.f32 %v980, %v981
        %v983 = vrot.slane %v982, 1
        %v984 = vadd.f32 %v982, %v983
        %986 = vrot.lane.b32.xlu0 %v984, 16
        %v987 = vpop.permute.xlu0 %986
        %v989 = vsel %vm814, %v883, %v987
        %vm990 = vcmask 253952
        %991 = vst.msk [vmem:[%s268] sm:$0x1] %vm990, %v989
        %v992 = vpack.c.bf16 %v735, %v735
        %v993 = vpack.c.bf16 %v737, %v737
        %v994 = vpack.c.bf16 %v740, %v740
        %v995 = vpack.c.bf16 %v742, %v742
        %v996 = vpack.c.bf16 %v745, %v745
        %v997 = vpack.c.bf16 %v747, %v747
        %v998 = vpack.c.bf16 %v750, %v750
        %v999 = vpack.c.bf16 %v752, %v752
        %v1000 = vpack.c.bf16 %v755, %v755
        %v1001 = vpack.c.bf16 %v757, %v757
        %v1002 = vpack.c.bf16 %v760, %v760
        %v1003 = vpack.c.bf16 %v762, %v762
        %v1004 = vpack.c.bf16 %v765, %v765
        %v1005 = vpack.c.bf16 %v767, %v767
        %v1006 = vpack.c.bf16 %v770, %v770
        %v1007 = vpack.c.bf16 %v772, %v772
        %v1008 = vpack.c.bf16 %v775, %v775
        %v1009 = vpack.c.bf16 %v777, %v777
        %v1010 = vpack.c.bf16 %v780, %v780
        %v1011 = vpack.c.bf16 %v782, %v782
        %v1012 = vpack.c.bf16 %v785, %v785
        %v1013 = vpack.c.bf16 %v787, %v787
        %v1014 = vpack.c.bf16 %v790, %v790
        %v1015 = vpack.c.bf16 %v792, %v792
        %v1016 = vpack.c.bf16 %v795, %v795
        %v1017 = vpack.c.bf16 %v797, %v797
        %v1018 = vpack.c.bf16 %v800, %v800
        %v1019 = vpack.c.bf16 %v802, %v802
        %v1020 = vpack.c.bf16 %v805, %v805
        %v1021 = vpack.c.bf16 %v807, %v807
        %v1022 = vpack.c.bf16 %v810, %v810
        %v1023 = vpack.c.bf16 %v812, %v812
        %vm1024 = vcmask 125952
        %1025 = vst.msk [vmem:[%s285] sm:$0xf] %vm1024, %v992
        %1026 = vst.msk [vmem:[%s285 + $0x4] sm:$0xf] %vm1024, %v993
        %1027 = vst.msk [vmem:[%s285 + $0x8] sm:$0xf] %vm1024, %v994
        %1028 = vst.msk [vmem:[%s285 + $0xc] sm:$0xf] %vm1024, %v995
        %1029 = vst.msk [vmem:[%s285 + $0x10] sm:$0xf] %vm1024, %v996
        %1030 = vst.msk [vmem:[%s285 + $0x14] sm:$0xf] %vm1024, %v997
        %1031 = vst.msk [vmem:[%s285 + $0x18] sm:$0xf] %vm1024, %v998
        %1032 = vst.msk [vmem:[%s285 + $0x1c] sm:$0xf] %vm1024, %v999
        %1033 = vst.msk [vmem:[%s285 + $0x20] sm:$0xf] %vm1024, %v1000
        %1034 = vst.msk [vmem:[%s285 + $0x24] sm:$0xf] %vm1024, %v1001
        %1035 = vst.msk [vmem:[%s285 + $0x28] sm:$0xf] %vm1024, %v1002
        %1036 = vst.msk [vmem:[%s285 + $0x2c] sm:$0xf] %vm1024, %v1003
        %1037 = vst.msk [vmem:[%s285 + $0x30] sm:$0xf] %vm1024, %v1004
        %1038 = vst.msk [vmem:[%s285 + $0x34] sm:$0xf] %vm1024, %v1005
        %1039 = vst.msk [vmem:[%s285 + $0x38] sm:$0xf] %vm1024, %v1006
        %1040 = vst.msk [vmem:[%s285 + $0x3c] sm:$0xf] %vm1024, %v1007
        %1041 = vst.msk [vmem:[%s285 + $0x40] sm:$0xf] %vm1024, %v1008
        %1042 = vst.msk [vmem:[%s285 + $0x44] sm:$0xf] %vm1024, %v1009
        %1043 = vst.msk [vmem:[%s285 + $0x48] sm:$0xf] %vm1024, %v1010
        %1044 = vst.msk [vmem:[%s285 + $0x4c] sm:$0xf] %vm1024, %v1011
        %1045 = vst.msk [vmem:[%s285 + $0x50] sm:$0xf] %vm1024, %v1012
        %1046 = vst.msk [vmem:[%s285 + $0x54] sm:$0xf] %vm1024, %v1013
        %1047 = vst.msk [vmem:[%s285 + $0x58] sm:$0xf] %vm1024, %v1014
        %1048 = vst.msk [vmem:[%s285 + $0x5c] sm:$0xf] %vm1024, %v1015
        %1049 = vst.msk [vmem:[%s285 + $0x60] sm:$0xf] %vm1024, %v1016
        %1050 = vst.msk [vmem:[%s285 + $0x64] sm:$0xf] %vm1024, %v1017
        %1051 = vst.msk [vmem:[%s285 + $0x68] sm:$0xf] %vm1024, %v1018
        %1052 = vst.msk [vmem:[%s285 + $0x6c] sm:$0xf] %vm1024, %v1019
        %1053 = vst.msk [vmem:[%s285 + $0x70] sm:$0xf] %vm1024, %v1020
        %1054 = vst.msk [vmem:[%s285 + $0x74] sm:$0xf] %vm1024, %v1021
        %1055 = vst.msk [vmem:[%s285 + $0x78] sm:$0xf] %vm1024, %v1022
        %1056 = vst.msk [vmem:[%s285 + $0x7c] sm:$0xf] %vm1024, %v1023
        %s1057 = smul.u32 32, %s24
        %p1058 = scmp.lt.s32.totalorder %s1057, 63
        %s1059 = scalar_select %p1058, %s1057, 63
        %s1060 = smul.addr %s1059, 4
        %s1061 = scalar_lea.vmem %s3, %s1060
        %s1062 = smul.u32 32, %s24
        %p1063 = scmp.lt.s32.totalorder %s1062, 63
        %s1064 = scalar_select %p1063, %s1062, 63
        %s1065 = smul.addr %s1064, 4
        %s1066 = scalar_lea.vmem %s4, %s1065
        %s1067 = sand.u32 %s152, 1
        %s1068 = scalar_lea.sflag [#allocation3], %s1067
        %s1069 = sand.u32 %s152, 1
        %s1070 = scalar_lea.vmem [#allocation2], %s1069
        %s1071 = sand.u32 %s178, 1
        %s1072 = scalar_lea.sflag [#allocation5], %s1071
        %s1073 = sand.u32 %s178, 1
        %s1074 = scalar_lea.vmem [#allocation4], %s1073
        // Predicated region
        $region33: #{tpu_custom_call.1} parent=31 // pred_check
          %p1075 = pneg %p110
        $region34: #{tpu_custom_call.1} parent=31 // pred_check_branch
          %1077 = sbr.rel (%p1075) target = $region36
        $region35: #{tpu_custom_call.1} parent=31 // pred_region
          %s1078 = smul.u32 32, %s24
        $region36: #{tpu_custom_call.1} parent=31 // pred_fallthru
          _
        // Predicated region
        $region37: #{tpu_custom_call.1} parent=31 // pred_check
          %p1079 = pneg %p136
        $region38: #{tpu_custom_call.1} parent=31 // pred_check_branch
          %1081 = sbr.rel (%p1079) target = $region40
        $region39: #{tpu_custom_call.1} parent=31 // pred_region
          %s1082 = smul.u32 32, %s24
        $region40: #{tpu_custom_call.1} parent=31 // pred_fallthru
          _
        // Predicated region
        $region41: #{tpu_custom_call.1} parent=31 // pred_check
          %p1083 = pneg %p162
        $region42: #{tpu_custom_call.1} parent=31 // pred_check_branch
          %1085 = sbr.rel (%p1083) target = $region44
        $region43: #{tpu_custom_call.1} parent=31 // pred_region
          %1087 = vsyncadd %s1068, 0
          %s1088 = scalar_lea.hbm %s5, %s24
          %s1090 = sshll.u32 %s1070, 4
          %s1091 = int_to_ptr.vmem [resolvable:$true] %s1090
          %s1092 = sshll.u32 %s1088, 4
          %s1093 = int_to_ptr.hbm [resolvable:$true] %s1092
          %1095 = dma.vmem_to_hbm [thread:$0]  %s1091, 16, %s1093, %s1068
        $region44: #{tpu_custom_call.1} parent=31 // pred_fallthru
          _
        // Predicated region
        $region45: #{tpu_custom_call.1} parent=31 // pred_check
          %p1096 = pneg %p188
        $region46: #{tpu_custom_call.1} parent=31 // pred_check_branch
          %1098 = sbr.rel (%p1096) target = $region48
        $region47: #{tpu_custom_call.1} parent=31 // pred_region
          %1100 = vsyncadd %s1072, 0
          %s1101 = scalar_lea.hbm %s6, %s24
          %s1103 = sshll.u32 %s1074, 4
          %s1104 = int_to_ptr.vmem [resolvable:$true] %s1103
          %s1105 = sshll.u32 %s1101, 4
          %s1106 = int_to_ptr.hbm [resolvable:$true] %s1105
          %1108 = dma.vmem_to_hbm [thread:$0]  %s1104, 16, %s1106, %s1072
        $region48: #{tpu_custom_call.1} parent=31 // pred_fallthru
          _
      $region32: #{tpu_custom_call.1} parent=5 // pred_fallthru
        _
      %p1109 = scmp.le.s32.totalorder 2, %s19
      // Predicated region
      $region49: #{tpu_custom_call.1} parent=5 // pred_check
        %p1110 = pneg %p1109
      $region50: #{tpu_custom_call.1} parent=5 // pred_check_branch
        %1112 = sbr.rel (%p1110) target = $region52
      $region51: #{tpu_custom_call.1} parent=5 // pred_region
        %s1113 = ssub.s32 %s19, 2
        // Predicated region
        $region53: #{tpu_custom_call.1} parent=51 // pred_check
          %p1114 = pneg %p116
        $region54: #{tpu_custom_call.1} parent=51 // pred_check_branch
          %1116 = sbr.rel (%p1114) target = $region56
        $region55: #{tpu_custom_call.1} parent=51 // pred_region
          %s1117 = smul.u32 32, %s25
          %p1118 = scmp.lt.s32.totalorder %s1117, 63
          %s1119 = scalar_select %p1118, %s1117, 63
          %s1120 = smul.addr %s1119, 4
          %s1121 = scalar_lea.vmem %s3, %s1120
        $region56: #{tpu_custom_call.1} parent=51 // pred_fallthru
          _
        // Predicated region
        $region57: #{tpu_custom_call.1} parent=51 // pred_check
          %p1122 = pneg %p142
        $region58: #{tpu_custom_call.1} parent=51 // pred_check_branch
          %1124 = sbr.rel (%p1122) target = $region60
        $region59: #{tpu_custom_call.1} parent=51 // pred_region
          %s1125 = smul.u32 32, %s25
          %p1126 = scmp.lt.s32.totalorder %s1125, 63
          %s1127 = scalar_select %p1126, %s1125, 63
          %s1128 = smul.addr %s1127, 4
          %s1129 = scalar_lea.vmem %s4, %s1128
        $region60: #{tpu_custom_call.1} parent=51 // pred_fallthru
          _
        // Predicated region
        $region61: #{tpu_custom_call.1} parent=51 // pred_check
          %p1130 = pneg %p168
        $region62: #{tpu_custom_call.1} parent=51 // pred_check_branch
          %1132 = sbr.rel (%p1130) target = $region64
        $region63: #{tpu_custom_call.1} parent=51 // pred_region
          %s1133 = sand.u32 %s153, 1
          %s1134 = scalar_lea.sflag [#allocation3], %s1133
          %s1135 = sand.u32 %s153, 1
          %s1136 = scalar_lea.vmem [#allocation2], %s1135
          %1138 = dma.done %s1134, 16
        $region64: #{tpu_custom_call.1} parent=51 // pred_fallthru
          _
        // Predicated region
        $region65: #{tpu_custom_call.1} parent=51 // pred_check
          %p1139 = pneg %p194
        $region66: #{tpu_custom_call.1} parent=51 // pred_check_branch
          %1141 = sbr.rel (%p1139) target = $region68
        $region67: #{tpu_custom_call.1} parent=51 // pred_region
          %s1142 = sand.u32 %s179, 1
          %s1143 = scalar_lea.sflag [#allocation5], %s1142
          %s1144 = sand.u32 %s179, 1
          %s1145 = scalar_lea.vmem [#allocation4], %s1144
          %1147 = dma.done %s1143, 16
        $region68: #{tpu_custom_call.1} parent=51 // pred_fallthru
          _
      $region52: #{tpu_custom_call.1} parent=5 // pred_fallthru
        _
    $region6: #{tpu_custom_call.1} parent=1 // loop_footer
      %s23 = sadd.s32 1, %s19
    $region7: #{tpu_custom_call.1} parent=1 // loop_footer_branch
      %18 = sbr.rel target = $region3
    $region8: #{tpu_custom_call.1} parent=1 // loop_exit
      _
    %1148 = vsyncpa [#allocation3], 1
    %s1149 = scalar_lea.sflag [#allocation3], 1
    %1150 = vsyncpa %s1149, 1
    %1151 = vsyncpa [#allocation5], 1
    %s1152 = scalar_lea.sflag [#allocation5], 1
    %1153 = vsyncpa %s1152, 1

</llo_original>
